<compile_context>
chip_gen: v7x
topology: tpu7x:2x2x1
jax: 0.10.0
libtpu: 0.0.40
codegen_flags: <defaults>
</compile_context>

<pallas_src>
import jax
import jax.numpy as jnp
from jax.experimental import pallas as pl
from jax.experimental.pallas import tpu as pltpu

HIDDEN = 64
OUT_DIM = 2
OUT_PAD = 128  # lane-dense fc3 width used only inside VMEM / the MXU


def _round_up(n, m):
    return ((n + m - 1) // m) * m


def mlp_kernel(x_ref, w1_ref, b1_ref, w2_ref, b2_ref, w3_ref, b3_ref, o_ref):
    # Hoist bias loads once per grid step.
    b1 = b1_ref[...]
    b2 = b2_ref[...]
    b3 = b3_ref[...]

    # x arrives as f32 straight from HBM; cast to bf16 in-kernel.
    x = x_ref[...].astype(jnp.bfloat16)

    # fc1 + ReLU : bf16 MXU inputs, f32 accumulation, elementwise math in f32.
    h1 = jnp.maximum(
        jnp.dot(x, w1_ref[...], preferred_element_type=jnp.float32) + b1, 0.0)
    # (dropout p=0.2: identity in eval/inference mode)

    # fc2 + ReLU
    h2 = jnp.maximum(
        jnp.dot(h1.astype(jnp.bfloat16), w2_ref[...],
                preferred_element_type=jnp.float32) + b2, 0.0)
    # (dropout p=0.2: identity in eval/inference mode)

    # fc3: compute a 128-lane (MXU-natural) f32 accumulator, but store only the
    # 2 real logit columns to HBM.
    acc = jnp.dot(h2.astype(jnp.bfloat16), w3_ref[...],
                  preferred_element_type=jnp.float32) + b3
    o_ref[...] = acc[:, :OUT_DIM].astype(o_ref.dtype)


def prepare_params(params):
    """One-time parameter prep (bf16 casts + fc3 lane padding).

    Hoisted out of net_forward so these tiny HBM-writing ops are not
    re-materialized on every forward call.
    """
    w1, b1, w2, b2, w3, b3 = params
    w1_bf = w1.astype(jnp.bfloat16)
    w2_bf = w2.astype(jnp.bfloat16)
    w3_p = jnp.zeros((HIDDEN, OUT_PAD), jnp.bfloat16).at[:, :OUT_DIM].set(
        w3.astype(jnp.bfloat16))
    b3_p = jnp.zeros((1, OUT_PAD), jnp.float32).at[:, :OUT_DIM].set(b3)
    return (w1_bf, b1.astype(jnp.float32), w2_bf, b2.astype(jnp.float32),
            w3_p, b3_p)


def net_forward(x, prepared_params, *, block_b=1024):
    """x: (B, F) f32. prepared_params from prepare_params(). Returns (B, 2) f32."""
    w1_bf, b1, w2_bf, b2, w3_p, b3_p = prepared_params
    B, F = x.shape

    # Tile selection:
    #  * small B: single full-array block -> no batch padding, grid=(1,).
    #  * large B: >=2 grid steps (v7x 2-TC sharding via "parallel"), 16-row
    #    aligned tiles (bf16 sublane packing), pad waste bounded to < 1 tile.
    if B <= 256:
        tb = B
        b_pad = B
    else:
        tb = min(block_b, _round_up(pl.cdiv(B, 2), 16))
        b_pad = _round_up(B, tb)

    x_in = x if b_pad == B else jnp.pad(x, ((0, b_pad - B), (0, 0)))
    grid = (b_pad // tb,)

    # VMEM budget (worst case, v7x 64 MiB phys / 32 MiB scoped): per-buffer
    # x tile = tb*128*4 B (F=30 pads to 128 lanes) = 512 KiB at tb=1024;
    # output tile <= 512 KiB; weights ~30 KiB. Double-buffered this is ~2 MiB.
    weight_bytes = ((F * HIDDEN + HIDDEN * HIDDEN + HIDDEN * OUT_PAD) * 2
                    + (HIDDEN + HIDDEN + OUT_PAD) * 4)
    cost = pl.CostEstimate(
        flops=2 * b_pad * (F * HIDDEN + HIDDEN * HIDDEN + HIDDEN * OUT_PAD),
        transcendentals=0,
        bytes_accessed=b_pad * F * 4 + b_pad * OUT_DIM * 4 + weight_bytes,
    )

    # Weights/biases: constant block index -> DMA'd once, VMEM-resident.
    resident = lambda shape: pl.BlockSpec(shape, lambda i: (0, 0))

    out = pl.pallas_call(
        mlp_kernel,
        out_shape=jax.ShapeDtypeStruct((b_pad, OUT_DIM), jnp.float32),
        grid=grid,
        in_specs=[
            pl.BlockSpec((tb, F), lambda i: (i, 0)),  # x (f32), batch-tiled
            resident(w1_bf.shape),
            resident(b1.shape),
            resident(w2_bf.shape),
            resident(b2.shape),
            resident(w3_p.shape),
            resident(b3_p.shape),
        ],
        out_specs=pl.BlockSpec((tb, OUT_DIM), lambda i: (i, 0)),
        compiler_params=pltpu.CompilerParams(
            dimension_semantics=("parallel",),
        ),
        cost_estimate=cost,
    )(x_in, w1_bf, b1, w2_bf, b2, w3_p, b3_p)

    return out if b_pad == B else out[:B]


def init_params(key, input_size):
    # Deterministic init mimicking PyTorch's uniform(-1/sqrt(fan_in), 1/sqrt(fan_in)).
    def linear(key, fan_in, fan_out):
        kw, kb = jax.random.split(key)
        bound = 1.0 / jnp.sqrt(fan_in)
        w = jax.random.uniform(kw, (fan_in, fan_out), jnp.float32, -bound, bound)
        b = jax.random.uniform(kb, (1, fan_out), jnp.float32, -bound, bound)
        return w, b

    k1, k2, k3 = jax.random.split(key, 3)
    w1, b1 = linear(k1, input_size, HIDDEN)
    w2, b2 = linear(k2, HIDDEN, HIDDEN)
    w3, b3 = linear(k3, HIDDEN, OUT_DIM)
    return (w1, b1, w2, b2, w3, b3)


if __name__ == "__main__":
    key = jax.random.PRNGKey(0)
    k_x, k_p = jax.random.split(key)

    batch = 8
    input_size = 30  # breast-cancer dataset feature count

    x = jax.random.normal(k_x, (batch, input_size), dtype=jnp.float32)
    params = init_params(k_p, input_size)
    prepped = prepare_params(params)

    out = net_forward(x, prepped)
    out = jax.block_until_ready(out)
    assert out.shape == (batch, OUT_DIM)

    # Pure-JAX reference with the same bf16-input / f32-accumulation recipe.
    w1, b1, w2, b2, w3, b3 = params
    xb = x.astype(jnp.bfloat16)
    w1b, w2b, w3b = (w.astype(jnp.bfloat16) for w in (w1, w2, w3))
    h1 = jnp.maximum(jnp.dot(xb, w1b, preferred_element_type=jnp.float32) + b1, 0.0)
    h2 = jnp.maximum(
        jnp.dot(h1.astype(jnp.bfloat16), w2b, preferred_element_type=jnp.float32) + b2,
        0.0,
    )
    ref = jnp.dot(h2.astype(jnp.bfloat16), w3b, preferred_element_type=jnp.float32) + b3
    assert jnp.allclose(out, ref, atol=2e-3, rtol=2e-3), \
        f"max abs err {jnp.max(jnp.abs(out - ref))}"

    # Sanity vs full-f32 math (bf16 cast error only).
    h1f = jnp.maximum(x @ w1 + b1, 0.0)
    h2f = jnp.maximum(h1f @ w2 + b2, 0.0)
    reff = h2f @ w3 + b3
    assert jnp.allclose(out, reff, atol=5e-2, rtol=5e-2)

    print("KERNEL_OK")
</pallas_src>

<mosaic_0001>
module attributes {stable_mosaic.version = 11 : i64} {
  func.func @mlp_kernel(%arg0: i32, %arg1: memref<8x30xf32, #tpu.memory_space<vmem>>, %arg2: memref<30x64xbf16, #tpu.memory_space<vmem>>, %arg3: memref<1x64xf32, #tpu.memory_space<vmem>>, %arg4: memref<64x64xbf16, #tpu.memory_space<vmem>>, %arg5: memref<1x64xf32, #tpu.memory_space<vmem>>, %arg6: memref<64x128xbf16, #tpu.memory_space<vmem>>, %arg7: memref<1x128xf32, #tpu.memory_space<vmem>>, %arg8: memref<8x2xf32, #tpu.memory_space<vmem>>) attributes {dimension_semantics = [#tpu.dimension_semantics<parallel>], iteration_bounds = array<i64: 1>, scalar_prefetch = 0 : i64, scratch_operands = 0 : i64, tpu.core_type = #tpu.core_type<tc>, window_params = [{transform_indices = @transform_0, window_bounds = array<i64: 8, 30>}, {pipeline_mode = #tpu.pipeline_mode<synchronous>, transform_indices = @transform_1, window_bounds = array<i64: 30, 64>}, {pipeline_mode = #tpu.pipeline_mode<synchronous>, transform_indices = @transform_2, window_bounds = array<i64: 1, 64>}, {pipeline_mode = #tpu.pipeline_mode<synchronous>, transform_indices = @transform_3, window_bounds = array<i64: 64, 64>}, {pipeline_mode = #tpu.pipeline_mode<synchronous>, transform_indices = @transform_4, window_bounds = array<i64: 1, 64>}, {pipeline_mode = #tpu.pipeline_mode<synchronous>, transform_indices = @transform_5, window_bounds = array<i64: 64, 128>}, {pipeline_mode = #tpu.pipeline_mode<synchronous>, transform_indices = @transform_6, window_bounds = array<i64: 1, 128>}, {transform_indices = @transform_7, window_bounds = array<i64: 8, 2>}]} {
    %c0 = arith.constant 0 : index
    %c0_0 = arith.constant 0 : index
    %0 = vector.load %arg3[%c0, %c0_0] : memref<1x64xf32, #tpu.memory_space<vmem>>, vector<1x64xf32>
    %c0_1 = arith.constant 0 : index
    %c0_2 = arith.constant 0 : index
    %1 = vector.load %arg5[%c0_1, %c0_2] : memref<1x64xf32, #tpu.memory_space<vmem>>, vector<1x64xf32>
    %c0_3 = arith.constant 0 : index
    %c0_4 = arith.constant 0 : index
    %2 = vector.load %arg7[%c0_3, %c0_4] : memref<1x128xf32, #tpu.memory_space<vmem>>, vector<1x128xf32>
    %c0_5 = arith.constant 0 : index
    %c0_6 = arith.constant 0 : index
    %3 = vector.load %arg1[%c0_5, %c0_6] : memref<8x30xf32, #tpu.memory_space<vmem>>, vector<8x30xf32>
    %4 = arith.truncf %3 : vector<8x30xf32> to vector<8x30xbf16>
    %c0_7 = arith.constant 0 : index
    %c0_8 = arith.constant 0 : index
    %5 = vector.load %arg2[%c0_7, %c0_8] : memref<30x64xbf16, #tpu.memory_space<vmem>>, vector<30x64xbf16>
    %cst = arith.constant dense<0.000000e+00> : vector<8x64xf32>
    %6 = tpu.matmul %4, %5, %cst {dimension_numbers = #tpu.dot_dimension_numbers<[1], [0], [0], [1], [0, 0, 1, 1], [], []>} : vector<8x30xbf16>, vector<30x64xbf16>, vector<8x64xf32> -> vector<8x64xf32>
    %7 = vector.broadcast %0 : vector<1x64xf32> to vector<8x64xf32>
    %8 = arith.addf %6, %7 : vector<8x64xf32>
    %cst_9 = arith.constant 0.000000e+00 : f32
    %9 = vector.broadcast %cst_9 : f32 to vector<8x64xf32>
    %10 = arith.maximumf %8, %9 : vector<8x64xf32>
    %11 = arith.truncf %10 : vector<8x64xf32> to vector<8x64xbf16>
    %c0_10 = arith.constant 0 : index
    %c0_11 = arith.constant 0 : index
    %12 = vector.load %arg4[%c0_10, %c0_11] : memref<64x64xbf16, #tpu.memory_space<vmem>>, vector<64x64xbf16>
    %cst_12 = arith.constant dense<0.000000e+00> : vector<8x64xf32>
    %13 = tpu.matmul %11, %12, %cst_12 {dimension_numbers = #tpu.dot_dimension_numbers<[1], [0], [0], [1], [0, 0, 1, 1], [], []>} : vector<8x64xbf16>, vector<64x64xbf16>, vector<8x64xf32> -> vector<8x64xf32>
    %14 = vector.broadcast %1 : vector<1x64xf32> to vector<8x64xf32>
    %15 = arith.addf %13, %14 : vector<8x64xf32>
    %cst_13 = arith.constant 0.000000e+00 : f32
    %16 = vector.broadcast %cst_13 : f32 to vector<8x64xf32>
    %17 = arith.maximumf %15, %16 : vector<8x64xf32>
    %18 = arith.truncf %17 : vector<8x64xf32> to vector<8x64xbf16>
    %c0_14 = arith.constant 0 : index
    %c0_15 = arith.constant 0 : index
    %19 = vector.load %arg6[%c0_14, %c0_15] : memref<64x128xbf16, #tpu.memory_space<vmem>>, vector<64x128xbf16>
    %cst_16 = arith.constant dense<0.000000e+00> : vector<8x128xf32>
    %20 = tpu.matmul %18, %19, %cst_16 {dimension_numbers = #tpu.dot_dimension_numbers<[1], [0], [0], [1], [0, 0, 1, 1], [], []>} : vector<8x64xbf16>, vector<64x128xbf16>, vector<8x128xf32> -> vector<8x128xf32>
    %21 = vector.broadcast %2 : vector<1x128xf32> to vector<8x128xf32>
    %22 = arith.addf %20, %21 : vector<8x128xf32>
    %23 = vector.extract_strided_slice %22 {offsets = [0, 0], sizes = [8, 2], strides = [1, 1]} : vector<8x128xf32> to vector<8x2xf32>
    %c0_17 = arith.constant 0 : index
    %c0_18 = arith.constant 0 : index
    %24 = vector.load %arg8[%c0_17, %c0_18] : memref<8x2xf32, #tpu.memory_space<vmem>>, vector<8x2xf32>
    tpu.vector_store %arg8[%c0_17, %c0_18], %23 {strides = array<i32>} : memref<8x2xf32, #tpu.memory_space<vmem>>, vector<8x2xf32>,
    return
  }
  func.func @transform_0(%arg0: i32) -> (i32, i32) {
    %c0_i32 = arith.constant 0 : i32
    %c0_i32_0 = arith.constant 0 : i32
    return %arg0, %c0_i32 : i32, i32
  }
  func.func @transform_1(%arg0: i32) -> (i32, i32) {
    %c0_i32 = arith.constant 0 : i32
    %c0_i32_0 = arith.constant 0 : i32
    %c0_i32_1 = arith.constant 0 : i32
    return %c0_i32, %c0_i32_0 : i32, i32
  }
  func.func @transform_2(%arg0: i32) -> (i32, i32) {
    %c0_i32 = arith.constant 0 : i32
    %c0_i32_0 = arith.constant 0 : i32
    %c0_i32_1 = arith.constant 0 : i32
    return %c0_i32, %c0_i32_0 : i32, i32
  }
  func.func @transform_3(%arg0: i32) -> (i32, i32) {
    %c0_i32 = arith.constant 0 : i32
    %c0_i32_0 = arith.constant 0 : i32
    %c0_i32_1 = arith.constant 0 : i32
    return %c0_i32, %c0_i32_0 : i32, i32
  }
  func.func @transform_4(%arg0: i32) -> (i32, i32) {
    %c0_i32 = arith.constant 0 : i32
    %c0_i32_0 = arith.constant 0 : i32
    %c0_i32_1 = arith.constant 0 : i32
    return %c0_i32, %c0_i32_0 : i32, i32
  }
  func.func @transform_5(%arg0: i32) -> (i32, i32) {
    %c0_i32 = arith.constant 0 : i32
    %c0_i32_0 = arith.constant 0 : i32
    %c0_i32_1 = arith.constant 0 : i32
    return %c0_i32, %c0_i32_0 : i32, i32
  }
  func.func @transform_6(%arg0: i32) -> (i32, i32) {
    %c0_i32 = arith.constant 0 : i32
    %c0_i32_0 = arith.constant 0 : i32
    %c0_i32_1 = arith.constant 0 : i32
    return %c0_i32, %c0_i32_0 : i32, i32
  }
  func.func @transform_7(%arg0: i32) -> (i32, i32) {
    %c0_i32 = arith.constant 0 : i32
    %c0_i32_0 = arith.constant 0 : i32
    return %arg0, %c0_i32 : i32, i32
  }
}

</mosaic_0001>

<llo_original>
// kernel: tpu_custom_call.1
$region0: #{tpu_custom_call.1}
  #allocation0 [shape = 'u32[]', space=smem, size = 0x4, offset = 0x4, fixed_abs, tag = 'smem constant byte address 0x4 - core index']
  #allocation1 [shape = 'u32[144,128]{1,0:T(1,128)}', space=vmem, size = 0x12000, scoped, tag = 'internal scratch']
  %s0 = inlined_call_operand.hbm [shape: f32[8,30], index: 0, kind: input, shape index: {}]
  %s1 = inlined_call_operand.hbm [shape: bf16[30,64], index: 1, kind: input, shape index: {}]
  %s2 = inlined_call_operand.vmem [shape: f32[1,64], index: 2, kind: input, shape index: {}]
  %s3 = inlined_call_operand.hbm [shape: bf16[64,64], index: 3, kind: input, shape index: {}]
  %s4 = inlined_call_operand.vmem [shape: f32[1,64], index: 4, kind: input, shape index: {}]
  %s5 = inlined_call_operand.hbm [shape: bf16[64,128], index: 5, kind: input, shape index: {}]
  %s6 = inlined_call_operand.vmem [shape: f32[1,128], index: 6, kind: input, shape index: {}]
  %s7 = inlined_call_operand.vmem [shape: f32[8,2], index: 7, kind: output, shape index: {}]
  %s8 = sld [smem:[#allocation0]]
  $region54: #{tpu_custom_call.1} parent=0
    _
  %s10 = ssub.s32 1, %s8
  %s11 = scalar_select 0, %s10, %s8
  $region1: #{tpu_custom_call.1} parent=0
    #allocation2 [shape = 'u8[4096]{0}', space=vmem, size = 0x1000, scoped, tag = 'input window, operand 0, single buffered']
    #allocation3 [shape = 's32[1]{0}', space=sflag, size = 0x4, scoped, tag = 'scoped memory for tpu_custom_call.1']
    #allocation4 [shape = 'u8[8192]{0}', space=vmem, size = 0x2000, scoped, tag = 'input window, operand 1, single buffered']
    #allocation5 [shape = 's32[1]{0}', space=sflag, size = 0x4, scoped, tag = 'scoped memory for tpu_custom_call.1']
    #allocation6 [shape = 'u8[16384]{0}', space=vmem, size = 0x4000, scoped, tag = 'input window, operand 3, single buffered']
    #allocation7 [shape = 'u8[16384]{0}', space=vmem, size = 0x4000, scoped, tag = 'input window, operand 5, single buffered']
    #allocation8 [shape = 's32[1]{0}', space=sflag, size = 0x4, scoped, tag = 'scoped memory for tpu_custom_call.1']
    %12 = vsyncpa [#allocation3], 0
    %13 = vsyncpa [#allocation5], 0
    %14 = vsyncpa [#allocation8], 0
    // Predicated region
    $region2: #{tpu_custom_call.1} parent=1 // pred_check
      _
    $region3: #{tpu_custom_call.1} parent=1 // pred_check_branch
      %16 = sbr.rel (0) target = $region5
    $region4: #{tpu_custom_call.1} parent=1 // pred_region
      %s18 = ssub.s32 128, 128
      %19 = vsyncadd [#allocation3], %s18
      %s21 = sshll.u32 [#allocation2], 4
      %s22 = int_to_ptr.vmem [resolvable:$true] %s21
      %24 = dma.hbm_to_vmem [thread:$0]  %s0, 128, %s22, [#allocation3]
    $region5: #{tpu_custom_call.1} parent=1 // pred_fallthru
      _
    // Predicated region
    $region6: #{tpu_custom_call.1} parent=1 // pred_check
      _
    $region7: #{tpu_custom_call.1} parent=1 // pred_check_branch
      %26 = sbr.rel (0) target = $region9
    $region8: #{tpu_custom_call.1} parent=1 // pred_region
      %s28 = ssub.s32 256, 256
      %29 = vsyncadd [#allocation5], %s28
      %s30 = sshll.u32 [#allocation4], 4
      %s31 = int_to_ptr.vmem [resolvable:$true] %s30
      %36 = dma.hbm_to_vmem [thread:$0]  %s1, 256, %s31, [#allocation5], 64, 64, 4
    $region9: #{tpu_custom_call.1} parent=1 // pred_fallthru
      _
    // Predicated region
    $region10: #{tpu_custom_call.1} parent=1 // pred_check
      _
    $region11: #{tpu_custom_call.1} parent=1 // pred_check_branch
      %38 = sbr.rel (0) target = $region13
    $region12: #{tpu_custom_call.1} parent=1 // pred_region
      _
    $region13: #{tpu_custom_call.1} parent=1 // pred_fallthru
      _
    // Predicated region
    $region14: #{tpu_custom_call.1} parent=1 // pred_check
      _
    $region15: #{tpu_custom_call.1} parent=1 // pred_check_branch
      %40 = sbr.rel (0) target = $region17
    $region16: #{tpu_custom_call.1} parent=1 // pred_region
      %s42 = ssub.s32 512, 512
      %43 = vsyncadd [#allocation5], %s42
      %s44 = sshll.u32 [#allocation6], 4
      %s45 = int_to_ptr.vmem [resolvable:$true] %s44
      %50 = dma.hbm_to_vmem [thread:$0]  %s3, 512, %s45, [#allocation5], 64, 64, 4
    $region17: #{tpu_custom_call.1} parent=1 // pred_fallthru
      _
    // Predicated region
    $region18: #{tpu_custom_call.1} parent=1 // pred_check
      _
    $region19: #{tpu_custom_call.1} parent=1 // pred_check_branch
      %52 = sbr.rel (0) target = $region21
    $region20: #{tpu_custom_call.1} parent=1 // pred_region
      _
    $region21: #{tpu_custom_call.1} parent=1 // pred_fallthru
      _
    // Predicated region
    $region22: #{tpu_custom_call.1} parent=1 // pred_check
      _
    $region23: #{tpu_custom_call.1} parent=1 // pred_check_branch
      %54 = sbr.rel (0) target = $region25
    $region24: #{tpu_custom_call.1} parent=1 // pred_region
      %s56 = ssub.s32 512, 512
      %57 = vsyncadd [#allocation8], %s56
      %s58 = sshll.u32 [#allocation7], 4
      %s59 = int_to_ptr.vmem [resolvable:$true] %s58
      %64 = dma.hbm_to_vmem [thread:$0]  %s5, 512, %s59, [#allocation8], 64, 64, 4
    $region25: #{tpu_custom_call.1} parent=1 // pred_fallthru
      _
    // Predicated region
    $region26: #{tpu_custom_call.1} parent=1 // pred_check
      _
    $region27: #{tpu_custom_call.1} parent=1 // pred_check_branch
      %66 = sbr.rel (0) target = $region29
    $region28: #{tpu_custom_call.1} parent=1 // pred_region
      _
    $region29: #{tpu_custom_call.1} parent=1 // pred_fallthru
      _
    // Predicated region
    $region30: #{tpu_custom_call.1} parent=1 // pred_check
      _
    $region31: #{tpu_custom_call.1} parent=1 // pred_check_branch
      %68 = sbr.rel (0) target = $region33
    $region32: #{tpu_custom_call.1} parent=1 // pred_region
      %69 = dma.done [#allocation3], 128
    $region33: #{tpu_custom_call.1} parent=1 // pred_fallthru
      _
    // Predicated region
    $region34: #{tpu_custom_call.1} parent=1 // pred_check
      _
    $region35: #{tpu_custom_call.1} parent=1 // pred_check_branch
      %71 = sbr.rel (0) target = $region37
    $region36: #{tpu_custom_call.1} parent=1 // pred_region
      %72 = dma.done [#allocation5], 256
    $region37: #{tpu_custom_call.1} parent=1 // pred_fallthru
      _
    // Predicated region
    $region38: #{tpu_custom_call.1} parent=1 // pred_check
      _
    $region39: #{tpu_custom_call.1} parent=1 // pred_check_branch
      %74 = sbr.rel (0) target = $region41
    $region40: #{tpu_custom_call.1} parent=1 // pred_region
      %75 = dma.done [#allocation5], 512
    $region41: #{tpu_custom_call.1} parent=1 // pred_fallthru
      _
    // Predicated region
    $region42: #{tpu_custom_call.1} parent=1 // pred_check
      _
    $region43: #{tpu_custom_call.1} parent=1 // pred_check_branch
      %77 = sbr.rel (0) target = $region45
    $region44: #{tpu_custom_call.1} parent=1 // pred_region
      %78 = dma.done [#allocation8], 512
    $region45: #{tpu_custom_call.1} parent=1 // pred_fallthru
      _
    %v80 = vld [vmem:[%s2] sm:$0x1]
    %v81 = vld [vmem:[%s4] sm:$0x1]
    %v82 = vld [vmem:[%s6] sm:$0x1]
    %v83 = vld [vmem:[#allocation2] sm:$0xff]
    %v84 = vpack.c.bf16 %v83, %v83
    %v85 = vld [vmem:[#allocation4] sm:$0xf]
    %v86 = vld [vmem:[#allocation4 + $0x4] sm:$0xf]
    %v87 = vld [vmem:[#allocation4 + $0x8] sm:$0xf]
    %v88 = vld [vmem:[#allocation4 + $0xc] sm:$0x7]
    %v90 = vlaneseq
    %v91 = vshrl.u32 %v90, 7
    %v92 = vsub.s32 0, %v91
    %v93 = vrot.slane %v80, %v92
    %v99 = vunpack.c.l.b16 %v85
    %v100 = vunpack.c.l.b16 %v86
    %v101 = vunpack.c.l.b16 %v87
    %v102 = vunpack.c.l.b16 %v88
    %v103 = vpack.c.b16 %v100, %v99
    %v104 = vpack.c.b16 %v102, %v101
    %vm106 = vcmask 244736
    %v108 = vsel %vm106, %v84, 0
    %vm110 = vcmask 1046528
    %v112 = vsel %vm110, %v104, 0
    %114 = vmatprep.subr.bf16.mxu0 0
    %115 = vmatpush1.bf16.msra.mxu0 %v103
    %116 = vmatprep.subr.bf16.mxu0 0
    %117 = vmatpush1.bf16.msra.mxu0 %v112
    %118 = vmatprep.subr.bf16.mxu0 0
    %119 = vmatpush1.bf16.msra.mxu0 0
    %120 = vmatprep.subr.bf16.mxu0 0
    %121 = vmatpush1.bf16.msra.mxu0 0
    %122 = vmatprep.subr.bf16.mxu0 0
    %123 = vmatpush1.bf16.msra.mxu0 0
    %124 = vmatprep.subr.bf16.mxu0 0
    %125 = vmatpush1.bf16.msra.mxu0 0
    %126 = vmatprep.subr.bf16.mxu0 0
    %127 = vmatpush1.bf16.msra.mxu0 0
    %128 = vmatprep.subr.bf16.mxu0 0
    %129 = vmatpush1.bf16.msra.mxu0 0
    %130 = vmatprep.subr.bf16.mxu0 0
    %131 = vmatpush1.bf16.msra.mxu0 0
    %132 = vmatprep.subr.bf16.mxu0 0
    %133 = vmatpush1.bf16.msra.mxu0 0
    %134 = vmatprep.subr.bf16.mxu0 0
    %135 = vmatpush1.bf16.msra.mxu0 0
    %136 = vmatprep.subr.bf16.mxu0 0
    %137 = vmatpush1.bf16.msra.mxu0 0
    %138 = vmatprep.subr.bf16.mxu0 0
    %139 = vmatpush1.bf16.msra.mxu0 0
    %140 = vmatprep.subr.bf16.mxu0 0
    %141 = vmatpush1.bf16.msra.mxu0 0
    %142 = vmatprep.subr.bf16.mxu0 0
    %143 = vmatpush1.bf16.msra.mxu0 0
    %144 = vmatprep.subr.bf16.mxu0 0
    %145 = vmatpush1.bf16.msra.mxu0 0
    %146 = vmatprep.mubr.bf16.mxu0 0
    %147 = vmatmul.mubr.bf16.gmra.mrb[0].mxu0 %v108
    %v148 = vpop.f32.mrb[0].mxu0
    %v149 = vadd.f32 %v93, %v148
    %v150 = vpop.f32.mrb[0].mxu0
    %v151 = vpop.f32.mrb[0].mxu0
    %v152 = vpop.f32.mrb[0].mxu0
    %153 = vdwg.mxu0
    %v154 = vmax.f32 %v149, 0.0
    %v155 = vpack.c.bf16 %v154, %v154
    %v156 = vld [vmem:[#allocation6] sm:$0xf]
    %v157 = vld [vmem:[#allocation6 + $0x4] sm:$0xf]
    %v158 = vld [vmem:[#allocation6 + $0x8] sm:$0xf]
    %v159 = vld [vmem:[#allocation6 + $0xc] sm:$0xf]
    %v160 = vld [vmem:[#allocation6 + $0x10] sm:$0xf]
    %v161 = vld [vmem:[#allocation6 + $0x14] sm:$0xf]
    %v162 = vld [vmem:[#allocation6 + $0x18] sm:$0xf]
    %v163 = vld [vmem:[#allocation6 + $0x1c] sm:$0xf]
    %v165 = vlaneseq
    %v166 = vshrl.u32 %v165, 7
    %v167 = vsub.s32 0, %v166
    %v168 = vrot.slane %v81, %v167
    %v178 = vunpack.c.l.b16 %v156
    %v179 = vunpack.c.l.b16 %v157
    %v180 = vunpack.c.l.b16 %v158
    %v181 = vunpack.c.l.b16 %v159
    %v182 = vunpack.c.l.b16 %v160
    %v183 = vunpack.c.l.b16 %v161
    %v184 = vunpack.c.l.b16 %v162
    %v185 = vunpack.c.l.b16 %v163
    %v186 = vpack.c.b16 %v179, %v178
    %v187 = vpack.c.b16 %v181, %v180
    %v188 = vpack.c.b16 %v183, %v182
    %v189 = vpack.c.b16 %v185, %v184
    %vm194 = vcmask 523264
    %v196 = vsel %vm194, %v155, 0
    %198 = vmatprep.subr.bf16.mxu0 0
    %199 = vmatpush1.bf16.msra.mxu0 %v186
    %200 = vmatprep.subr.bf16.mxu0 0
    %201 = vmatpush1.bf16.msra.mxu0 %v187
    %202 = vmatprep.subr.bf16.mxu0 0
    %203 = vmatpush1.bf16.msra.mxu0 %v188
    %204 = vmatprep.subr.bf16.mxu0 0
    %205 = vmatpush1.bf16.msra.mxu0 %v189
    %206 = vmatprep.subr.bf16.mxu0 0
    %207 = vmatpush1.bf16.msra.mxu0 0
    %208 = vmatprep.subr.bf16.mxu0 0
    %209 = vmatpush1.bf16.msra.mxu0 0
    %210 = vmatprep.subr.bf16.mxu0 0
    %211 = vmatpush1.bf16.msra.mxu0 0
    %212 = vmatprep.subr.bf16.mxu0 0
    %213 = vmatpush1.bf16.msra.mxu0 0
    %214 = vmatprep.subr.bf16.mxu0 0
    %215 = vmatpush1.bf16.msra.mxu0 0
    %216 = vmatprep.subr.bf16.mxu0 0
    %217 = vmatpush1.bf16.msra.mxu0 0
    %218 = vmatprep.subr.bf16.mxu0 0
    %219 = vmatpush1.bf16.msra.mxu0 0
    %220 = vmatprep.subr.bf16.mxu0 0
    %221 = vmatpush1.bf16.msra.mxu0 0
    %222 = vmatprep.subr.bf16.mxu0 0
    %223 = vmatpush1.bf16.msra.mxu0 0
    %224 = vmatprep.subr.bf16.mxu0 0
    %225 = vmatpush1.bf16.msra.mxu0 0
    %226 = vmatprep.subr.bf16.mxu0 0
    %227 = vmatpush1.bf16.msra.mxu0 0
    %228 = vmatprep.subr.bf16.mxu0 0
    %229 = vmatpush1.bf16.msra.mxu0 0
    %230 = vmatprep.mubr.bf16.mxu0 0
    %231 = vmatmul.mubr.bf16.gmra.mrb[0].mxu0 %v196
    %v232 = vpop.f32.mrb[0].mxu0
    %v233 = vadd.f32 %v168, %v232
    %v234 = vpop.f32.mrb[0].mxu0
    %v235 = vpop.f32.mrb[0].mxu0
    %v236 = vpop.f32.mrb[0].mxu0
    %237 = vdwg.mxu0
    %v238 = vmax.f32 %v233, 0.0
    %v239 = vpack.c.bf16 %v238, %v238
    %v240 = vld [vmem:[#allocation7] sm:$0xf]
    %v241 = vld [vmem:[#allocation7 + $0x4] sm:$0xf]
    %v242 = vld [vmem:[#allocation7 + $0x8] sm:$0xf]
    %v243 = vld [vmem:[#allocation7 + $0xc] sm:$0xf]
    %v244 = vld [vmem:[#allocation7 + $0x10] sm:$0xf]
    %v245 = vld [vmem:[#allocation7 + $0x14] sm:$0xf]
    %v246 = vld [vmem:[#allocation7 + $0x18] sm:$0xf]
    %v247 = vld [vmem:[#allocation7 + $0x1c] sm:$0xf]
    %v249 = vlaneseq
    %v250 = vshrl.u32 %v249, 7
    %v251 = vsub.s32 0, %v250
    %v252 = vrot.slane %v82, %v251
    %v262 = vunpack.c.l.b16 %v240
    %v263 = vunpack.c.l.b16 %v241
    %v264 = vunpack.c.l.b16 %v242
    %v265 = vunpack.c.l.b16 %v243
    %v266 = vunpack.c.l.b16 %v244
    %v267 = vunpack.c.l.b16 %v245
    %v268 = vunpack.c.l.b16 %v246
    %v269 = vunpack.c.l.b16 %v247
    %v270 = vpack.c.b16 %v263, %v262
    %v271 = vpack.c.b16 %v265, %v264
    %v272 = vpack.c.b16 %v267, %v266
    %v273 = vpack.c.b16 %v269, %v268
    %v279 = vsel %vm194, %v239, 0
    %281 = vmatprep.subr.bf16.mxu0 0
    %282 = vmatpush1.bf16.msra.mxu0 %v270
    %283 = vmatprep.subr.bf16.mxu0 0
    %284 = vmatpush1.bf16.msra.mxu0 %v271
    %285 = vmatprep.subr.bf16.mxu0 0
    %286 = vmatpush1.bf16.msra.mxu0 %v272
    %287 = vmatprep.subr.bf16.mxu0 0
    %288 = vmatpush1.bf16.msra.mxu0 %v273
    %289 = vmatprep.subr.bf16.mxu0 0
    %290 = vmatpush1.bf16.msra.mxu0 0
    %291 = vmatprep.subr.bf16.mxu0 0
    %292 = vmatpush1.bf16.msra.mxu0 0
    %293 = vmatprep.subr.bf16.mxu0 0
    %294 = vmatpush1.bf16.msra.mxu0 0
    %295 = vmatprep.subr.bf16.mxu0 0
    %296 = vmatpush1.bf16.msra.mxu0 0
    %297 = vmatprep.subr.bf16.mxu0 0
    %298 = vmatpush1.bf16.msra.mxu0 0
    %299 = vmatprep.subr.bf16.mxu0 0
    %300 = vmatpush1.bf16.msra.mxu0 0
    %301 = vmatprep.subr.bf16.mxu0 0
    %302 = vmatpush1.bf16.msra.mxu0 0
    %303 = vmatprep.subr.bf16.mxu0 0
    %304 = vmatpush1.bf16.msra.mxu0 0
    %305 = vmatprep.subr.bf16.mxu0 0
    %306 = vmatpush1.bf16.msra.mxu0 0
    %307 = vmatprep.subr.bf16.mxu0 0
    %308 = vmatpush1.bf16.msra.mxu0 0
    %309 = vmatprep.subr.bf16.mxu0 0
    %310 = vmatpush1.bf16.msra.mxu0 0
    %311 = vmatprep.subr.bf16.mxu0 0
    %312 = vmatpush1.bf16.msra.mxu0 0
    %313 = vmatprep.mubr.bf16.mxu0 0
    %314 = vmatmul.mubr.bf16.gmra.mrb[0].mxu0 %v279
    %v315 = vpop.f32.mrb[0].mxu0
    %v316 = vadd.f32 %v252, %v315
    %v317 = vpop.f32.mrb[0].mxu0
    %v318 = vpop.f32.mrb[0].mxu0
    %v319 = vpop.f32.mrb[0].mxu0
    %320 = vdwg.mxu0
    %vm321 = vcmask 15360
    %322 = vst.msk [vmem:[%s7] sm:$0xff] %vm321, %v316
    // Predicated region
    $region46: #{tpu_custom_call.1} parent=1 // pred_check
      _
    $region47: #{tpu_custom_call.1} parent=1 // pred_check_branch
      %324 = sbr.rel (0) target = $region49
    $region48: #{tpu_custom_call.1} parent=1 // pred_region
      _
    $region49: #{tpu_custom_call.1} parent=1 // pred_fallthru
      _
    // Predicated region
    $region50: #{tpu_custom_call.1} parent=1 // pred_check
      _
    $region51: #{tpu_custom_call.1} parent=1 // pred_check_branch
      %326 = sbr.rel (0) target = $region53
    $region52: #{tpu_custom_call.1} parent=1 // pred_region
      _
    $region53: #{tpu_custom_call.1} parent=1 // pred_fallthru
      _
    %327 = vsyncpa [#allocation3], 1
    %328 = vsyncpa [#allocation5], 1
    %329 = vsyncpa [#allocation8], 1

</llo_original>
